<compile_context>
chip_gen: v6e
topology: v6e:2x2x1
jax: 0.10.0
libtpu: 0.0.40
codegen_flags: <defaults>
</compile_context>

<pallas_src>
import functools

import jax
import jax.numpy as jnp
from jax.experimental import pallas as pl
from jax.experimental.pallas import tpu as pltpu


def _round_up(x, m):
    return pl.cdiv(x, m) * m


def _minecart_kernel(xT_ref, w1_ref, b1_ref, w2_ref, b2_ref, w3_ref, b3_ref,
                     o_ref):
    """Fused 3-layer MLP + log-softmax, transposed (features, batch) layout."""
    xT = xT_ref[...].astype(jnp.float32)                      # (6,  TB)

    # Layer 1: tanh(W1 @ x^T + b1)   -> (H, TB), batch on lanes
    h1 = jnp.tanh(
        jnp.dot(w1_ref[...], xT, preferred_element_type=jnp.float32)
        + b1_ref[...])

    # Layer 2: tanh(W2 @ h1 + b2)    -> (H, TB)
    h2 = jnp.tanh(
        jnp.dot(w2_ref[...], h1, preferred_element_type=jnp.float32)
        + b2_ref[...])

    # Layer 3: W3 @ h2 + b3          -> (nA, TB)
    logits = (jnp.dot(w3_ref[...], h2, preferred_element_type=jnp.float32)
              + b3_ref[...])

    # LogSoftmax over the class axis (axis=0 in transposed layout),
    # numerically stabilized. Class reduction is a cheap sublane reduce
    # (nA rows); all element-wise work is lane-dense over the batch.
    m = jnp.max(logits, axis=0, keepdims=True)                # (1, TB)
    z = logits - m
    lse = jnp.log(jnp.sum(jnp.exp(z), axis=0, keepdims=True)) # (1, TB)
    o_ref[...] = (z - lse).astype(o_ref.dtype)


def minecart_forward(state, params, *, batch_tile=None):
    """MinecartModel forward pass via a single Pallas kernel.

    state:  (B, 6) array. May be f32 or bf16 (bf16 halves input HBM traffic on
            v6e/v7x; the kernel always computes in f32, like PyTorch .float()).
    params: dict in PyTorch Linear layout:
            w1 (H, 6), b1 (H,), w2 (H, H), b2 (H,), w3 (nA, H), b3 (nA,).
    Returns (B, nA) log-probabilities, f32.
    """
    w1, b1 = params["w1"], params["b1"]
    w2, b2 = params["w2"], params["b2"]
    w3, b3 = params["w3"], params["b3"]

    B, in_dim = state.shape
    H = w1.shape[0]
    nA = w3.shape[0]

    # Lane-dense batch tiling: batch maps to the 128-lane axis. Default tile
    # of 512 rows -> multi-step "parallel" grid for large B (pipelining + both
    # v7x TensorCores), clamped down for small batches, always a multiple of
    # 128 lanes so input/output stores are unmasked.
    if batch_tile is None:
        batch_tile = 512
    batch_tile = max(128, min(int(batch_tile), int(_round_up(B, 128))))
    batch_tile = int(_round_up(batch_tile, 128))
    B_pad = int(_round_up(B, batch_tile))
    grid = (B_pad // batch_tile,)

    # Layout plumbing in the wrapper: pad batch, put batch on the last (lane)
    # axis. Kept in the caller's dtype; the kernel casts to f32 after the DMA.
    xT = jnp.pad(state, ((0, B_pad - B), (0, 0))).T            # (6, B_pad)

    f32 = jnp.float32
    w1c, w2c, w3c = w1.astype(f32), w2.astype(f32), w3.astype(f32)
    b1c = b1.reshape(H, 1).astype(f32)
    b2c = b2.reshape(H, 1).astype(f32)
    b3c = b3.reshape(nA, 1).astype(f32)

    # Whole-array blocks for the (tiny, resident) weights/biases.
    full = lambda shape: pl.BlockSpec(shape, lambda i: (0, 0))

    itemsize = jnp.dtype(state.dtype).itemsize
    cost = pl.CostEstimate(
        flops=2 * B_pad * (in_dim * H + H * H + H * nA),
        transcendentals=B_pad * (2 * H + nA + 1),          # tanh + exp + log
        bytes_accessed=int(in_dim * B_pad * itemsize       # state in
                           + nA * B_pad * 4                # log-probs out
                           + (in_dim * H + H * H + H * nA + 2 * H + nA) * 4),
    )

    outT = pl.pallas_call(
        _minecart_kernel,
        out_shape=jax.ShapeDtypeStruct((nA, B_pad), jnp.float32),
        grid_spec=pltpu.PrefetchScalarGridSpec(
            num_scalar_prefetch=0,
            grid=grid,
            in_specs=[
                pl.BlockSpec((in_dim, batch_tile), lambda i: (0, i)),  # x^T
                full((H, in_dim)),   # w1
                full((H, 1)),        # b1
                full((H, H)),        # w2
                full((H, 1)),        # b2
                full((nA, H)),       # w3
                full((nA, 1)),       # b3
            ],
            out_specs=pl.BlockSpec((nA, batch_tile), lambda i: (0, i)),
        ),
        compiler_params=pltpu.CompilerParams(
            dimension_semantics=("parallel",)),
        cost_estimate=cost,
    )(xT, w1c, b1c, w2c, b2c, w3c, b3c)

    # Back to (B, nA) row-major, dropping the batch padding.
    return outT[:, :B].T


def init_params(key, hidden, nA, in_dim=6):
    """Deterministic synthetic parameters (PyTorch Linear layout + init)."""
    ks = jax.random.split(key, 6)

    def linear(kw, kb, fan_in, fan_out):
        bound = 1.0 / jnp.sqrt(jnp.float32(fan_in))
        w = jax.random.uniform(kw, (fan_out, fan_in), jnp.float32,
                               -bound, bound)
        b = jax.random.uniform(kb, (fan_out,), jnp.float32, -bound, bound)
        return w, b

    w1, b1 = linear(ks[0], ks[1], in_dim, hidden)
    w2, b2 = linear(ks[2], ks[3], hidden, hidden)
    w3, b3 = linear(ks[4], ks[5], hidden, nA)
    return {"w1": w1, "b1": b1, "w2": w2, "b2": b2, "w3": w3, "b3": b3}


def _reference_forward(state, params):
    """Pure-JAX reference (PyTorch semantics) for correctness checking."""
    x = state.astype(jnp.float32)
    h1 = jnp.tanh(x @ params["w1"].T + params["b1"])
    h2 = jnp.tanh(h1 @ params["w2"].T + params["b2"])
    logits = h2 @ params["w3"].T + params["b3"]
    return jax.nn.log_softmax(logits, axis=1)


if __name__ == "__main__":
    key = jax.random.PRNGKey(0)
    k_param, k_state = jax.random.split(key)

    B, IN, HIDDEN, NA = 8, 6, 64, 4   # small shapes; hidden matches module default
    params = init_params(k_param, hidden=HIDDEN, nA=NA, in_dim=IN)
    state = jax.random.normal(k_state, (B, IN), dtype=jnp.float32)

    out = minecart_forward(state, params)
    out = jax.block_until_ready(out)

    ref = _reference_forward(state, params)
    assert out.shape == (B, NA)
    assert jnp.allclose(out, ref, atol=2e-5, rtol=2e-5), "mismatch vs reference"

    print("KERNEL_OK")
</pallas_src>

<mosaic_0001>
module attributes {stable_mosaic.version = 11 : i64} {
  func.func @_minecart_kernel(%arg0: i32, %arg1: memref<6x128xf32, #tpu.memory_space<vmem>>, %arg2: memref<64x6xf32, #tpu.memory_space<vmem>>, %arg3: memref<64x1xf32, #tpu.memory_space<vmem>>, %arg4: memref<64x64xf32, #tpu.memory_space<vmem>>, %arg5: memref<64x1xf32, #tpu.memory_space<vmem>>, %arg6: memref<4x64xf32, #tpu.memory_space<vmem>>, %arg7: memref<4x1xf32, #tpu.memory_space<vmem>>, %arg8: memref<4x128xf32, #tpu.memory_space<vmem>>) attributes {dimension_semantics = [#tpu.dimension_semantics<parallel>], iteration_bounds = array<i64: 1>, scalar_prefetch = 0 : i64, scratch_operands = 0 : i64, tpu.core_type = #tpu.core_type<tc>, window_params = [{transform_indices = @transform_0, window_bounds = array<i64: 6, 128>}, {pipeline_mode = #tpu.pipeline_mode<synchronous>, transform_indices = @transform_1, window_bounds = array<i64: 64, 6>}, {pipeline_mode = #tpu.pipeline_mode<synchronous>, transform_indices = @transform_2, window_bounds = array<i64: 64, 1>}, {pipeline_mode = #tpu.pipeline_mode<synchronous>, transform_indices = @transform_3, window_bounds = array<i64: 64, 64>}, {pipeline_mode = #tpu.pipeline_mode<synchronous>, transform_indices = @transform_4, window_bounds = array<i64: 64, 1>}, {pipeline_mode = #tpu.pipeline_mode<synchronous>, transform_indices = @transform_5, window_bounds = array<i64: 4, 64>}, {pipeline_mode = #tpu.pipeline_mode<synchronous>, transform_indices = @transform_6, window_bounds = array<i64: 4, 1>}, {transform_indices = @transform_7, window_bounds = array<i64: 4, 128>}]} {
    %c0 = arith.constant 0 : index
    %c0_0 = arith.constant 0 : index
    %0 = vector.load %arg1[%c0, %c0_0] : memref<6x128xf32, #tpu.memory_space<vmem>>, vector<6x128xf32>
    %c0_1 = arith.constant 0 : index
    %c0_2 = arith.constant 0 : index
    %1 = vector.load %arg2[%c0_1, %c0_2] : memref<64x6xf32, #tpu.memory_space<vmem>>, vector<64x6xf32>
    %cst = arith.constant dense<0.000000e+00> : vector<64x128xf32>
    %2 = tpu.matmul %1, %0, %cst {dimension_numbers = #tpu.dot_dimension_numbers<[1], [0], [0], [1], [0, 0, 1, 1], [], []>} : vector<64x6xf32>, vector<6x128xf32>, vector<64x128xf32> -> vector<64x128xf32>
    %c0_3 = arith.constant 0 : index
    %c0_4 = arith.constant 0 : index
    %3 = vector.load %arg3[%c0_3, %c0_4] : memref<64x1xf32, #tpu.memory_space<vmem>>, vector<64x1xf32>
    %4 = vector.broadcast %3 : vector<64x1xf32> to vector<64x128xf32>
    %5 = arith.addf %2, %4 : vector<64x128xf32>
    %6 = math.tanh %5 : vector<64x128xf32>
    %c0_5 = arith.constant 0 : index
    %c0_6 = arith.constant 0 : index
    %7 = vector.load %arg4[%c0_5, %c0_6] : memref<64x64xf32, #tpu.memory_space<vmem>>, vector<64x64xf32>
    %cst_7 = arith.constant dense<0.000000e+00> : vector<64x128xf32>
    %8 = tpu.matmul %7, %6, %cst_7 {dimension_numbers = #tpu.dot_dimension_numbers<[1], [0], [0], [1], [0, 0, 1, 1], [], []>} : vector<64x64xf32>, vector<64x128xf32>, vector<64x128xf32> -> vector<64x128xf32>
    %c0_8 = arith.constant 0 : index
    %c0_9 = arith.constant 0 : index
    %9 = vector.load %arg5[%c0_8, %c0_9] : memref<64x1xf32, #tpu.memory_space<vmem>>, vector<64x1xf32>
    %10 = vector.broadcast %9 : vector<64x1xf32> to vector<64x128xf32>
    %11 = arith.addf %8, %10 : vector<64x128xf32>
    %12 = math.tanh %11 : vector<64x128xf32>
    %c0_10 = arith.constant 0 : index
    %c0_11 = arith.constant 0 : index
    %13 = vector.load %arg6[%c0_10, %c0_11] : memref<4x64xf32, #tpu.memory_space<vmem>>, vector<4x64xf32>
    %cst_12 = arith.constant dense<0.000000e+00> : vector<4x128xf32>
    %14 = tpu.matmul %13, %12, %cst_12 {dimension_numbers = #tpu.dot_dimension_numbers<[1], [0], [0], [1], [0, 0, 1, 1], [], []>} : vector<4x64xf32>, vector<64x128xf32>, vector<4x128xf32> -> vector<4x128xf32>
    %c0_13 = arith.constant 0 : index
    %c0_14 = arith.constant 0 : index
    %15 = vector.load %arg7[%c0_13, %c0_14] : memref<4x1xf32, #tpu.memory_space<vmem>>, vector<4x1xf32>
    %16 = vector.broadcast %15 : vector<4x1xf32> to vector<4x128xf32>
    %17 = arith.addf %14, %16 : vector<4x128xf32>
    %cst_15 = arith.constant dense<0xFF800000> : vector<128xf32>
    %18 = vector.multi_reduction <maximumf>, %17, %cst_15 [0] : vector<4x128xf32> to vector<128xf32>
    %19 = vector.shape_cast %18 : vector<128xf32> to vector<1x128xf32>
    %20 = vector.broadcast %19 : vector<1x128xf32> to vector<4x128xf32>
    %21 = arith.subf %17, %20 : vector<4x128xf32>
    %22 = math.exp %21 : vector<4x128xf32>
    %cst_16 = arith.constant dense<0.000000e+00> : vector<128xf32>
    %23 = vector.multi_reduction <add>, %22, %cst_16 [0] : vector<4x128xf32> to vector<128xf32>
    %24 = vector.shape_cast %23 : vector<128xf32> to vector<1x128xf32>
    %25 = math.log %24 : vector<1x128xf32>
    %26 = vector.broadcast %25 : vector<1x128xf32> to vector<4x128xf32>
    %27 = arith.subf %21, %26 : vector<4x128xf32>
    %c0_17 = arith.constant 0 : index
    %c0_18 = arith.constant 0 : index
    %28 = vector.load %arg8[%c0_17, %c0_18] : memref<4x128xf32, #tpu.memory_space<vmem>>, vector<4x128xf32>
    tpu.vector_store %arg8[%c0_17, %c0_18], %27 {strides = array<i32>} : memref<4x128xf32, #tpu.memory_space<vmem>>, vector<4x128xf32>,
    return
  }
  func.func @transform_0(%arg0: i32) -> (i32, i32) {
    %c0_i32 = arith.constant 0 : i32
    %c0_i32_0 = arith.constant 0 : i32
    return %c0_i32, %arg0 : i32, i32
  }
  func.func @transform_1(%arg0: i32) -> (i32, i32) {
    %c0_i32 = arith.constant 0 : i32
    %c0_i32_0 = arith.constant 0 : i32
    %c0_i32_1 = arith.constant 0 : i32
    return %c0_i32, %c0_i32_0 : i32, i32
  }
  func.func @transform_2(%arg0: i32) -> (i32, i32) {
    %c0_i32 = arith.constant 0 : i32
    %c0_i32_0 = arith.constant 0 : i32
    %c0_i32_1 = arith.constant 0 : i32
    return %c0_i32, %c0_i32_0 : i32, i32
  }
  func.func @transform_3(%arg0: i32) -> (i32, i32) {
    %c0_i32 = arith.constant 0 : i32
    %c0_i32_0 = arith.constant 0 : i32
    %c0_i32_1 = arith.constant 0 : i32
    return %c0_i32, %c0_i32_0 : i32, i32
  }
  func.func @transform_4(%arg0: i32) -> (i32, i32) {
    %c0_i32 = arith.constant 0 : i32
    %c0_i32_0 = arith.constant 0 : i32
    %c0_i32_1 = arith.constant 0 : i32
    return %c0_i32, %c0_i32_0 : i32, i32
  }
  func.func @transform_5(%arg0: i32) -> (i32, i32) {
    %c0_i32 = arith.constant 0 : i32
    %c0_i32_0 = arith.constant 0 : i32
    %c0_i32_1 = arith.constant 0 : i32
    return %c0_i32, %c0_i32_0 : i32, i32
  }
  func.func @transform_6(%arg0: i32) -> (i32, i32) {
    %c0_i32 = arith.constant 0 : i32
    %c0_i32_0 = arith.constant 0 : i32
    %c0_i32_1 = arith.constant 0 : i32
    return %c0_i32, %c0_i32_0 : i32, i32
  }
  func.func @transform_7(%arg0: i32) -> (i32, i32) {
    %c0_i32 = arith.constant 0 : i32
    %c0_i32_0 = arith.constant 0 : i32
    return %c0_i32, %arg0 : i32, i32
  }
}

</mosaic_0001>

<llo_original>
// kernel: tpu_custom_call.1
$region0: #{tpu_custom_call.1}
  #allocation0 [shape = 'u32[]', space=smem, size = 0x4, offset = 0x4, fixed_abs, tag = 'smem constant byte address 0x4 - core index']
  #allocation1 [shape = 'u32[144,128]{1,0:T(1,128)}', space=vmem, size = 0x12000, scoped, tag = 'internal scratch']
  %s0 = inlined_call_operand.vmem [shape: f32[6,128], index: 0, kind: input, shape index: {}]
  %s1 = inlined_call_operand.vmem [shape: f32[64,6], index: 1, kind: input, shape index: {}]
  %s2 = inlined_call_operand.vmem [shape: f32[64,1], index: 2, kind: input, shape index: {}]
  %s3 = inlined_call_operand.vmem [shape: f32[64,64], index: 3, kind: input, shape index: {}]
  %s4 = inlined_call_operand.vmem [shape: f32[64,1], index: 4, kind: input, shape index: {}]
  %s5 = inlined_call_operand.vmem [shape: f32[4,64], index: 5, kind: input, shape index: {}]
  %s6 = inlined_call_operand.vmem [shape: f32[4,1], index: 6, kind: input, shape index: {}]
  %s7 = inlined_call_operand.hbm [shape: f32[4,128], index: 7, kind: output, shape index: {}]
  %s8 = sld [smem:[#allocation0]]
  $region38: #{tpu_custom_call.1} parent=0
    _
  %s10 = ssub.s32 1, %s8
  %s11 = scalar_select 0, %s10, %s8
  $region1: #{tpu_custom_call.1} parent=0
    #allocation2 [shape = 'u8[2048]{0}', space=vmem, size = 0x800, scoped, tag = 'output window, operand 0, single buffered']
    #allocation3 [shape = 's32[1]{0}', space=sflag, size = 0x4, scoped, tag = 'scoped memory for tpu_custom_call.1']
    %12 = vsyncpa [#allocation3], 0
    // Predicated region
    $region2: #{tpu_custom_call.1} parent=1 // pred_check
      _
    $region3: #{tpu_custom_call.1} parent=1 // pred_check_branch
      %14 = sbr.rel (0) target = $region5
    $region4: #{tpu_custom_call.1} parent=1 // pred_region
      _
    $region5: #{tpu_custom_call.1} parent=1 // pred_fallthru
      _
    // Predicated region
    $region6: #{tpu_custom_call.1} parent=1 // pred_check
      _
    $region7: #{tpu_custom_call.1} parent=1 // pred_check_branch
      %16 = sbr.rel (0) target = $region9
    $region8: #{tpu_custom_call.1} parent=1 // pred_region
      _
    $region9: #{tpu_custom_call.1} parent=1 // pred_fallthru
      _
    // Predicated region
    $region10: #{tpu_custom_call.1} parent=1 // pred_check
      _
    $region11: #{tpu_custom_call.1} parent=1 // pred_check_branch
      %18 = sbr.rel (0) target = $region13
    $region12: #{tpu_custom_call.1} parent=1 // pred_region
      _
    $region13: #{tpu_custom_call.1} parent=1 // pred_fallthru
      _
    // Predicated region
    $region14: #{tpu_custom_call.1} parent=1 // pred_check
      _
    $region15: #{tpu_custom_call.1} parent=1 // pred_check_branch
      %20 = sbr.rel (0) target = $region17
    $region16: #{tpu_custom_call.1} parent=1 // pred_region
      _
    $region17: #{tpu_custom_call.1} parent=1 // pred_fallthru
      _
    // Predicated region
    $region18: #{tpu_custom_call.1} parent=1 // pred_check
      _
    $region19: #{tpu_custom_call.1} parent=1 // pred_check_branch
      %22 = sbr.rel (0) target = $region21
    $region20: #{tpu_custom_call.1} parent=1 // pred_region
      _
    $region21: #{tpu_custom_call.1} parent=1 // pred_fallthru
      _
    // Predicated region
    $region22: #{tpu_custom_call.1} parent=1 // pred_check
      _
    $region23: #{tpu_custom_call.1} parent=1 // pred_check_branch
      %24 = sbr.rel (0) target = $region25
    $region24: #{tpu_custom_call.1} parent=1 // pred_region
      _
    $region25: #{tpu_custom_call.1} parent=1 // pred_fallthru
      _
    // Predicated region
    $region26: #{tpu_custom_call.1} parent=1 // pred_check
      _
    $region27: #{tpu_custom_call.1} parent=1 // pred_check_branch
      %26 = sbr.rel (0) target = $region29
    $region28: #{tpu_custom_call.1} parent=1 // pred_region
      _
    $region29: #{tpu_custom_call.1} parent=1 // pred_fallthru
      _
    %v27 = vld [vmem:[%s0] sm:$0x3f]
    %v28 = vld [vmem:[%s1] sm:$0xff]
    %v29 = vld [vmem:[%s1 + $0x8] sm:$0xff]
    %v30 = vld [vmem:[%s1 + $0x10] sm:$0xff]
    %v31 = vld [vmem:[%s1 + $0x18] sm:$0xff]
    %v32 = vld [vmem:[%s1 + $0x20] sm:$0xff]
    %v33 = vld [vmem:[%s1 + $0x28] sm:$0xff]
    %v34 = vld [vmem:[%s1 + $0x30] sm:$0xff]
    %v35 = vld [vmem:[%s1 + $0x38] sm:$0xff]
    %v36 = vld [vmem:[%s2] sm:$0xff]
    %v37 = vld [vmem:[%s2 + $0x8] sm:$0xff]
    %v38 = vld [vmem:[%s2 + $0x10] sm:$0xff]
    %v39 = vld [vmem:[%s2 + $0x18] sm:$0xff]
    %v40 = vld [vmem:[%s2 + $0x20] sm:$0xff]
    %v41 = vld [vmem:[%s2 + $0x28] sm:$0xff]
    %v42 = vld [vmem:[%s2 + $0x30] sm:$0xff]
    %v43 = vld [vmem:[%s2 + $0x38] sm:$0xff]
    %45 = vset.pattern.permute.xlu0 0
    %46 = vperm.xlu0 %45, %v36
    %v47 = vpop.permute.xlu0 %46
    %50 = vset.pattern.permute.xlu0 0
    %51 = vperm.xlu0 %50, %v37
    %v52 = vpop.permute.xlu0 %51
    %55 = vset.pattern.permute.xlu0 0
    %56 = vperm.xlu0 %55, %v38
    %v57 = vpop.permute.xlu0 %56
    %60 = vset.pattern.permute.xlu0 0
    %61 = vperm.xlu0 %60, %v39
    %v62 = vpop.permute.xlu0 %61
    %65 = vset.pattern.permute.xlu0 0
    %66 = vperm.xlu0 %65, %v40
    %v67 = vpop.permute.xlu0 %66
    %70 = vset.pattern.permute.xlu0 0
    %71 = vperm.xlu0 %70, %v41
    %v72 = vpop.permute.xlu0 %71
    %75 = vset.pattern.permute.xlu0 0
    %76 = vperm.xlu0 %75, %v42
    %v77 = vpop.permute.xlu0 %76
    %80 = vset.pattern.permute.xlu0 0
    %81 = vperm.xlu0 %80, %v43
    %v82 = vpop.permute.xlu0 %81
    %vm84 = vcmask 48128
    %v86 = vsel %vm84, %v28, 0
    %v89 = vsel %vm84, %v29, 0
    %v92 = vsel %vm84, %v30, 0
    %v95 = vsel %vm84, %v31, 0
    %v98 = vsel %vm84, %v32, 0
    %v101 = vsel %vm84, %v33, 0
    %v104 = vsel %vm84, %v34, 0
    %v107 = vsel %vm84, %v35, 0
    %vm109 = vcmask 1045504
    %v111 = vsel %vm109, %v27, 0
    %113 = vmatprep.subr.mxu0 0.0
    %114 = vmatpush1.msra.mxu0 0.0
    %115 = vmatprep.subr.mxu0 0.0
    %116 = vmatpush1.msra.mxu0 0.0
    %117 = vmatprep.subr.mxu0 0.0
    %118 = vmatpush1.msra.mxu0 0.0
    %119 = vmatprep.subr.mxu0 0.0
    %120 = vmatpush1.msra.mxu0 0.0
    %121 = vmatprep.subr.mxu0 0.0
    %122 = vmatpush1.msra.mxu0 0.0
    %123 = vmatprep.subr.mxu0 0.0
    %124 = vmatpush1.msra.mxu0 0.0
    %125 = vmatprep.subr.mxu0 0.0
    %126 = vmatpush1.msra.mxu0 0.0
    %127 = vmatprep.subr.mxu0 0.0
    %128 = vmatpush1.msra.mxu0 0.0
    %129 = vmatprep.subr.mxu0 0.0
    %130 = vmatpush1.msra.mxu0 0.0
    %131 = vmatprep.subr.mxu0 0.0
    %132 = vmatpush1.msra.mxu0 0.0
    %133 = vmatprep.subr.mxu0 0.0
    %134 = vmatpush1.msra.mxu0 0.0
    %135 = vmatprep.subr.mxu0 0.0
    %136 = vmatpush1.msra.mxu0 0.0
    %137 = vmatprep.subr.mxu0 0.0
    %138 = vmatpush1.msra.mxu0 0.0
    %139 = vmatprep.subr.mxu0 0.0
    %140 = vmatpush1.msra.mxu0 0.0
    %141 = vmatprep.subr.mxu0 0.0
    %142 = vmatpush1.msra.mxu0 0.0
    %143 = vmatprep.subr.mxu0 0.0
    %144 = vmatpush1.msra.mxu0 %v111
    %145 = vmatprep.subr.mxu0 0.0
    %146 = vmatpush2.msra.mxu0 0.0
    %147 = vmatprep.subr.mxu0 0.0
    %148 = vmatpush2.msra.mxu0 0.0
    %149 = vmatprep.subr.mxu0 0.0
    %150 = vmatpush2.msra.mxu0 0.0
    %151 = vmatprep.subr.mxu0 0.0
    %152 = vmatpush2.msra.mxu0 0.0
    %153 = vmatprep.subr.mxu0 0.0
    %154 = vmatpush2.msra.mxu0 0.0
    %155 = vmatprep.subr.mxu0 0.0
    %156 = vmatpush2.msra.mxu0 0.0
    %157 = vmatprep.subr.mxu0 0.0
    %158 = vmatpush2.msra.mxu0 0.0
    %159 = vmatprep.subr.mxu0 0.0
    %160 = vmatpush2.msra.mxu0 0.0
    %161 = vmatprep.subr.mxu0 0.0
    %162 = vmatpush2.msra.mxu0 0.0
    %163 = vmatprep.subr.mxu0 0.0
    %164 = vmatpush2.msra.mxu0 0.0
    %165 = vmatprep.subr.mxu0 0.0
    %166 = vmatpush2.msra.mxu0 0.0
    %167 = vmatprep.subr.mxu0 0.0
    %168 = vmatpush2.msra.mxu0 0.0
    %169 = vmatprep.subr.mxu0 0.0
    %170 = vmatpush2.msra.mxu0 0.0
    %171 = vmatprep.subr.mxu0 0.0
    %172 = vmatpush2.msra.mxu0 0.0
    %173 = vmatprep.subr.mxu0 0.0
    %174 = vmatpush2.msra.mxu0 0.0
    %175 = vmatprep.subr.mxu0 0.0
    %176 = vmatpush2.msra.mxu0 0.0
    %177 = vmatprep.mubr.f32.mxu0 0.0
    %178 = vmatmul.mubr.f32.gmra.mxu0 %v86
    %v179 = vpop.f32.mrf.mxu0
    %v180 = vadd.f32 %v47, %v179
    %v181 = vpop.f32.mrf.mxu0
    %182 = vmatprep.mubr.f32.mxu0 0.0
    %183 = vmatmul.mubr.f32.gmra.mxu0 %v89
    %v184 = vpop.f32.mrf.mxu0
    %v185 = vadd.f32 %v52, %v184
    %v186 = vpop.f32.mrf.mxu0
    %187 = vmatprep.mubr.f32.mxu0 0.0
    %188 = vmatmul.mubr.f32.gmra.mxu0 %v92
    %v189 = vpop.f32.mrf.mxu0
    %v190 = vadd.f32 %v57, %v189
    %v191 = vpop.f32.mrf.mxu0
    %192 = vmatprep.mubr.f32.mxu0 0.0
    %193 = vmatmul.mubr.f32.gmra.mxu0 %v95
    %v194 = vpop.f32.mrf.mxu0
    %v195 = vadd.f32 %v62, %v194
    %v196 = vpop.f32.mrf.mxu0
    %197 = vmatprep.mubr.f32.mxu0 0.0
    %198 = vmatmul.mubr.f32.gmra.mxu0 %v98
    %v199 = vpop.f32.mrf.mxu0
    %v200 = vadd.f32 %v67, %v199
    %v201 = vpop.f32.mrf.mxu0
    %202 = vmatprep.mubr.f32.mxu0 0.0
    %203 = vmatmul.mubr.f32.gmra.mxu0 %v101
    %v204 = vpop.f32.mrf.mxu0
    %v205 = vadd.f32 %v72, %v204
    %v206 = vpop.f32.mrf.mxu0
    %207 = vmatprep.mubr.f32.mxu0 0.0
    %208 = vmatmul.mubr.f32.gmra.mxu0 %v104
    %v209 = vpop.f32.mrf.mxu0
    %v210 = vadd.f32 %v77, %v209
    %v211 = vpop.f32.mrf.mxu0
    %212 = vmatprep.mubr.f32.mxu0 0.0
    %213 = vmatmul.mubr.f32.gmra.mxu0 %v107
    %v214 = vpop.f32.mrf.mxu0
    %v215 = vadd.f32 %v82, %v214
    %v216 = vpop.f32.mrf.mxu0
    %217 = vdwg.mxu0
    %v218 = vtanh.pop %v180
    %v219 = vtanh.pop %v185
    %v220 = vtanh.pop %v190
    %v221 = vtanh.pop %v195
    %v222 = vtanh.pop %v200
    %v223 = vtanh.pop %v205
    %v224 = vtanh.pop %v210
    %v225 = vtanh.pop %v215
    %v226 = vld [vmem:[%s3] sm:$0xff]
    %v227 = vld [vmem:[%s3 + $0x8] sm:$0xff]
    %v228 = vld [vmem:[%s3 + $0x10] sm:$0xff]
    %v229 = vld [vmem:[%s3 + $0x18] sm:$0xff]
    %v230 = vld [vmem:[%s3 + $0x20] sm:$0xff]
    %v231 = vld [vmem:[%s3 + $0x28] sm:$0xff]
    %v232 = vld [vmem:[%s3 + $0x30] sm:$0xff]
    %v233 = vld [vmem:[%s3 + $0x38] sm:$0xff]
    %v234 = vld [vmem:[%s4] sm:$0xff]
    %v235 = vld [vmem:[%s4 + $0x8] sm:$0xff]
    %v236 = vld [vmem:[%s4 + $0x10] sm:$0xff]
    %v237 = vld [vmem:[%s4 + $0x18] sm:$0xff]
    %v238 = vld [vmem:[%s4 + $0x20] sm:$0xff]
    %v239 = vld [vmem:[%s4 + $0x28] sm:$0xff]
    %v240 = vld [vmem:[%s4 + $0x30] sm:$0xff]
    %v241 = vld [vmem:[%s4 + $0x38] sm:$0xff]
    %243 = vset.pattern.permute.xlu0 0
    %244 = vperm.xlu0 %243, %v234
    %v245 = vpop.permute.xlu0 %244
    %248 = vset.pattern.permute.xlu0 0
    %249 = vperm.xlu0 %248, %v235
    %v250 = vpop.permute.xlu0 %249
    %253 = vset.pattern.permute.xlu0 0
    %254 = vperm.xlu0 %253, %v236
    %v255 = vpop.permute.xlu0 %254
    %258 = vset.pattern.permute.xlu0 0
    %259 = vperm.xlu0 %258, %v237
    %v260 = vpop.permute.xlu0 %259
    %263 = vset.pattern.permute.xlu0 0
    %264 = vperm.xlu0 %263, %v238
    %v265 = vpop.permute.xlu0 %264
    %268 = vset.pattern.permute.xlu0 0
    %269 = vperm.xlu0 %268, %v239
    %v270 = vpop.permute.xlu0 %269
    %273 = vset.pattern.permute.xlu0 0
    %274 = vperm.xlu0 %273, %v240
    %v275 = vpop.permute.xlu0 %274
    %278 = vset.pattern.permute.xlu0 0
    %279 = vperm.xlu0 %278, %v241
    %v280 = vpop.permute.xlu0 %279
    %vm282 = vcmask 523264
    %v284 = vsel %vm282, %v226, 0
    %v287 = vsel %vm282, %v227, 0
    %v290 = vsel %vm282, %v228, 0
    %v293 = vsel %vm282, %v229, 0
    %v296 = vsel %vm282, %v230, 0
    %v299 = vsel %vm282, %v231, 0
    %v302 = vsel %vm282, %v232, 0
    %v305 = vsel %vm282, %v233, 0
    %307 = vmatprep.subr.mxu0 0.0
    %308 = vmatpush1.msra.mxu0 0.0
    %309 = vmatprep.subr.mxu0 0.0
    %310 = vmatpush1.msra.mxu0 0.0
    %311 = vmatprep.subr.mxu0 0.0
    %312 = vmatpush1.msra.mxu0 0.0
    %313 = vmatprep.subr.mxu0 0.0
    %314 = vmatpush1.msra.mxu0 0.0
    %315 = vmatprep.subr.mxu0 0.0
    %316 = vmatpush1.msra.mxu0 0.0
    %317 = vmatprep.subr.mxu0 0.0
    %318 = vmatpush1.msra.mxu0 0.0
    %319 = vmatprep.subr.mxu0 0.0
    %320 = vmatpush1.msra.mxu0 0.0
    %321 = vmatprep.subr.mxu0 0.0
    %322 = vmatpush1.msra.mxu0 0.0
    %323 = vmatprep.subr.mxu0 0.0
    %324 = vmatpush1.msra.mxu0 %v225
    %325 = vmatprep.subr.mxu0 0.0
    %326 = vmatpush1.msra.mxu0 %v224
    %327 = vmatprep.subr.mxu0 0.0
    %328 = vmatpush1.msra.mxu0 %v223
    %329 = vmatprep.subr.mxu0 0.0
    %330 = vmatpush1.msra.mxu0 %v222
    %331 = vmatprep.subr.mxu0 0.0
    %332 = vmatpush1.msra.mxu0 %v221
    %333 = vmatprep.subr.mxu0 0.0
    %334 = vmatpush1.msra.mxu0 %v220
    %335 = vmatprep.subr.mxu0 0.0
    %336 = vmatpush1.msra.mxu0 %v219
    %337 = vmatprep.subr.mxu0 0.0
    %338 = vmatpush1.msra.mxu0 %v218
    %339 = vmatprep.subr.mxu0 0.0
    %340 = vmatpush2.msra.mxu0 0.0
    %341 = vmatprep.subr.mxu0 0.0
    %342 = vmatpush2.msra.mxu0 0.0
    %343 = vmatprep.subr.mxu0 0.0
    %344 = vmatpush2.msra.mxu0 0.0
    %345 = vmatprep.subr.mxu0 0.0
    %346 = vmatpush2.msra.mxu0 0.0
    %347 = vmatprep.subr.mxu0 0.0
    %348 = vmatpush2.msra.mxu0 0.0
    %349 = vmatprep.subr.mxu0 0.0
    %350 = vmatpush2.msra.mxu0 0.0
    %351 = vmatprep.subr.mxu0 0.0
    %352 = vmatpush2.msra.mxu0 0.0
    %353 = vmatprep.subr.mxu0 0.0
    %354 = vmatpush2.msra.mxu0 0.0
    %355 = vmatprep.subr.mxu0 0.0
    %356 = vmatpush2.msra.mxu0 0.0
    %357 = vmatprep.subr.mxu0 0.0
    %358 = vmatpush2.msra.mxu0 0.0
    %359 = vmatprep.subr.mxu0 0.0
    %360 = vmatpush2.msra.mxu0 0.0
    %361 = vmatprep.subr.mxu0 0.0
    %362 = vmatpush2.msra.mxu0 0.0
    %363 = vmatprep.subr.mxu0 0.0
    %364 = vmatpush2.msra.mxu0 0.0
    %365 = vmatprep.subr.mxu0 0.0
    %366 = vmatpush2.msra.mxu0 0.0
    %367 = vmatprep.subr.mxu0 0.0
    %368 = vmatpush2.msra.mxu0 0.0
    %369 = vmatprep.subr.mxu0 0.0
    %370 = vmatpush2.msra.mxu0 0.0
    %371 = vmatprep.mubr.f32.mxu0 0.0
    %372 = vmatmul.mubr.f32.gmra.mxu0 %v284
    %v373 = vpop.f32.mrf.mxu0
    %v374 = vadd.f32 %v245, %v373
    %v375 = vpop.f32.mrf.mxu0
    %376 = vmatprep.mubr.f32.mxu0 0.0
    %377 = vmatmul.mubr.f32.gmra.mxu0 %v287
    %v378 = vpop.f32.mrf.mxu0
    %v379 = vadd.f32 %v250, %v378
    %v380 = vpop.f32.mrf.mxu0
    %381 = vmatprep.mubr.f32.mxu0 0.0
    %382 = vmatmul.mubr.f32.gmra.mxu0 %v290
    %v383 = vpop.f32.mrf.mxu0
    %v384 = vadd.f32 %v255, %v383
    %v385 = vpop.f32.mrf.mxu0
    %386 = vmatprep.mubr.f32.mxu0 0.0
    %387 = vmatmul.mubr.f32.gmra.mxu0 %v293
    %v388 = vpop.f32.mrf.mxu0
    %v389 = vadd.f32 %v260, %v388
    %v390 = vpop.f32.mrf.mxu0
    %391 = vmatprep.mubr.f32.mxu0 0.0
    %392 = vmatmul.mubr.f32.gmra.mxu0 %v296
    %v393 = vpop.f32.mrf.mxu0
    %v394 = vadd.f32 %v265, %v393
    %v395 = vpop.f32.mrf.mxu0
    %396 = vmatprep.mubr.f32.mxu0 0.0
    %397 = vmatmul.mubr.f32.gmra.mxu0 %v299
    %v398 = vpop.f32.mrf.mxu0
    %v399 = vadd.f32 %v270, %v398
    %v400 = vpop.f32.mrf.mxu0
    %401 = vmatprep.mubr.f32.mxu0 0.0
    %402 = vmatmul.mubr.f32.gmra.mxu0 %v302
    %v403 = vpop.f32.mrf.mxu0
    %v404 = vadd.f32 %v275, %v403
    %v405 = vpop.f32.mrf.mxu0
    %406 = vmatprep.mubr.f32.mxu0 0.0
    %407 = vmatmul.mubr.f32.gmra.mxu0 %v305
    %v408 = vpop.f32.mrf.mxu0
    %v409 = vadd.f32 %v280, %v408
    %v410 = vpop.f32.mrf.mxu0
    %411 = vdwg.mxu0
    %v412 = vtanh.pop %v374
    %v413 = vtanh.pop %v379
    %v414 = vtanh.pop %v384
    %v415 = vtanh.pop %v389
    %v416 = vtanh.pop %v394
    %v417 = vtanh.pop %v399
    %v418 = vtanh.pop %v404
    %v419 = vtanh.pop %v409
    %v420 = vld [vmem:[%s5] sm:$0xf]
    %v421 = vld [vmem:[%s6] sm:$0xf]
    %423 = vset.pattern.permute.xlu0 0
    %424 = vperm.xlu0 %423, %v421
    %v425 = vpop.permute.xlu0 %424
    %v428 = vsel %vm282, %v420, 0
    %430 = vmatprep.subr.mxu0 0.0
    %431 = vmatpush1.msra.mxu0 0.0
    %432 = vmatprep.subr.mxu0 0.0
    %433 = vmatpush1.msra.mxu0 0.0
    %434 = vmatprep.subr.mxu0 0.0
    %435 = vmatpush1.msra.mxu0 0.0
    %436 = vmatprep.subr.mxu0 0.0
    %437 = vmatpush1.msra.mxu0 0.0
    %438 = vmatprep.subr.mxu0 0.0
    %439 = vmatpush1.msra.mxu0 0.0
    %440 = vmatprep.subr.mxu0 0.0
    %441 = vmatpush1.msra.mxu0 0.0
    %442 = vmatprep.subr.mxu0 0.0
    %443 = vmatpush1.msra.mxu0 0.0
    %444 = vmatprep.subr.mxu0 0.0
    %445 = vmatpush1.msra.mxu0 0.0
    %446 = vmatprep.subr.mxu0 0.0
    %447 = vmatpush1.msra.mxu0 %v419
    %448 = vmatprep.subr.mxu0 0.0
    %449 = vmatpush1.msra.mxu0 %v418
    %450 = vmatprep.subr.mxu0 0.0
    %451 = vmatpush1.msra.mxu0 %v417
    %452 = vmatprep.subr.mxu0 0.0
    %453 = vmatpush1.msra.mxu0 %v416
    %454 = vmatprep.subr.mxu0 0.0
    %455 = vmatpush1.msra.mxu0 %v415
    %456 = vmatprep.subr.mxu0 0.0
    %457 = vmatpush1.msra.mxu0 %v414
    %458 = vmatprep.subr.mxu0 0.0
    %459 = vmatpush1.msra.mxu0 %v413
    %460 = vmatprep.subr.mxu0 0.0
    %461 = vmatpush1.msra.mxu0 %v412
    %462 = vmatprep.subr.mxu0 0.0
    %463 = vmatpush2.msra.mxu0 0.0
    %464 = vmatprep.subr.mxu0 0.0
    %465 = vmatpush2.msra.mxu0 0.0
    %466 = vmatprep.subr.mxu0 0.0
    %467 = vmatpush2.msra.mxu0 0.0
    %468 = vmatprep.subr.mxu0 0.0
    %469 = vmatpush2.msra.mxu0 0.0
    %470 = vmatprep.subr.mxu0 0.0
    %471 = vmatpush2.msra.mxu0 0.0
    %472 = vmatprep.subr.mxu0 0.0
    %473 = vmatpush2.msra.mxu0 0.0
    %474 = vmatprep.subr.mxu0 0.0
    %475 = vmatpush2.msra.mxu0 0.0
    %476 = vmatprep.subr.mxu0 0.0
    %477 = vmatpush2.msra.mxu0 0.0
    %478 = vmatprep.subr.mxu0 0.0
    %479 = vmatpush2.msra.mxu0 0.0
    %480 = vmatprep.subr.mxu0 0.0
    %481 = vmatpush2.msra.mxu0 0.0
    %482 = vmatprep.subr.mxu0 0.0
    %483 = vmatpush2.msra.mxu0 0.0
    %484 = vmatprep.subr.mxu0 0.0
    %485 = vmatpush2.msra.mxu0 0.0
    %486 = vmatprep.subr.mxu0 0.0
    %487 = vmatpush2.msra.mxu0 0.0
    %488 = vmatprep.subr.mxu0 0.0
    %489 = vmatpush2.msra.mxu0 0.0
    %490 = vmatprep.subr.mxu0 0.0
    %491 = vmatpush2.msra.mxu0 0.0
    %492 = vmatprep.subr.mxu0 0.0
    %493 = vmatpush2.msra.mxu0 0.0
    %494 = vmatprep.mubr.f32.mxu0 0.0
    %495 = vmatmul.mubr.f32.gmra.mxu0 %v428
    %v496 = vpop.f32.mrf.mxu0
    %v497 = vadd.f32 %v425, %v496
    %v498 = vpop.f32.mrf.mxu0
    %499 = vdwg.mxu0
    %vm500 = vcmask 1043456
    %v501 = vsel %vm500, %v497, -inf
    %v502 = vrot.slane %v501, 4
    %v503 = vmax.f32 %v501, %v502
    %v504 = vrot.slane %v503, 2
    %v505 = vmax.f32 %v503, %v504
    %v506 = vrot.slane %v505, 1
    %v507 = vmax.f32 %v505, %v506
    %v508 = vsub.f32 %v497, %v507
    %v509 = vmul.f32 %v508, 1.442695
    %v510 = vpow.pop %v509
    %v511 = vsel %vm500, %v510, 0.0
    %v512 = vrot.slane %v511, 4
    %v513 = vadd.f32 %v511, %v512
    %v514 = vrot.slane %v513, 2
    %v515 = vadd.f32 %v513, %v514
    %v516 = vrot.slane %v515, 1
    %v517 = vadd.f32 %v515, %v516
    %v518 = vlog2.pop %v517
    %v519 = vmul.f32 %v518, 0.6931472
    %v520 = vsub.f32 %v508, %v519
    %521 = vst [vmem:[#allocation2] sm:$0xf] %v520
    // Predicated region
    $region30: #{tpu_custom_call.1} parent=1 // pred_check
      _
    $region31: #{tpu_custom_call.1} parent=1 // pred_check_branch
      %523 = sbr.rel (0) target = $region33
    $region32: #{tpu_custom_call.1} parent=1 // pred_region
      %s525 = ssub.s32 64, 64
      %526 = vsyncadd [#allocation3], %s525
      %s528 = sshll.u32 [#allocation2], 4
      %s529 = int_to_ptr.vmem [resolvable:$true] %s528
      %531 = dma.vmem_to_hbm [thread:$0]  %s529, 64, %s7, [#allocation3]
    $region33: #{tpu_custom_call.1} parent=1 // pred_fallthru
      _
    // Predicated region
    $region34: #{tpu_custom_call.1} parent=1 // pred_check
      _
    $region35: #{tpu_custom_call.1} parent=1 // pred_check_branch
      %533 = sbr.rel (0) target = $region37
    $region36: #{tpu_custom_call.1} parent=1 // pred_region
      %534 = dma.done [#allocation3], 64
    $region37: #{tpu_custom_call.1} parent=1 // pred_fallthru
      _
    %535 = vsyncpa [#allocation3], 1

</llo_original>
